<compile_context>
chip_gen: v5e
topology: v5e:2x2
jax: 0.10.0
libtpu: 0.0.40
codegen_flags: <defaults>
</compile_context>

<pallas_src>
import jax
import jax.numpy as jnp
from jax.experimental import pallas as pl
from jax.experimental.pallas import tpu as pltpu


def self_attention_kernel(x_ref, w1_ref, b1_ref, w2_ref, b2_ref, o_ref):
    TB, T, H = x_ref.shape
    x = x_ref[...]                                   # native dtype (bf16/f32) -- no block upcast

    # Linear(H, H//2) + ReLU: the only real matmul -> MXU, f32 accumulation.
    h = jnp.dot(x.reshape(TB * T, H), w1_ref[...],
                preferred_element_type=jnp.float32)
    h = jnp.maximum(h + b1_ref[...], 0.0)            # (TB*T, Hh) f32

    # Linear(H//2, 1): rank-1 -> keep it off the MXU. VPU multiply + lane reduce;
    # keepdims keeps the energies in a T-on-sublane (TB, T, 1) layout so no
    # lane<->sublane transpose is needed before or after the softmax.
    e = jnp.sum(h.reshape(TB, T, -1) * w2_ref[...][None, :, :],
                axis=-1, keepdims=True)              # (TB, T, 1) f32
    e = e + b2_ref[...].reshape(1, 1, 1)

    # Numerically stable softmax over the sequence axis (axis=1, sublanes).
    e = e - jnp.max(e, axis=1, keepdims=True)
    p = jnp.exp(e)
    denom = jnp.sum(p, axis=1, keepdims=True)        # (TB, 1, 1)
    w = p * pl.reciprocal(denom, approx=True)        # one EUP reciprocal per row

    # Weighted sum over T: lane-broadcast of the per-(b, t) scalar weight, then a
    # sublane reduce. x * w promotes to f32, giving an f32 output accumulation.
    out = jnp.sum(x * w, axis=1)                     # (TB, H) f32
    o_ref[...] = out.astype(o_ref.dtype)


def _vmem_capacity_bytes():
    """Physical VMEM of the current TPU generation, with a conservative fallback."""
    try:
        info = pltpu.get_tpu_info()
        cap = int(getattr(info, "vmem_capacity_bytes", 0) or 0)
        if cap > 0:
            return cap
    except Exception:
        pass
    return 64 * 1024 * 1024  # v7x-sized fallback (smallest current generation)


def _pick_block_b(B, T, H, itemsize, budget_bytes, target_rows):
    """Choose batch rows per grid step.

    Accounts for the per-row VMEM working set (double-buffered native-dtype x
    tile + f32 h activation + f32 weighted product), targets >= target_rows MXU
    rows per step, keeps >= 2 grid steps when B >= 16 (so both v7x TensorCores
    get work), and keeps the block a multiple of 8 sublanes (unmasked output
    stores) unless a single full-batch block is used.
    """
    # per-row bytes: 2*itemsize (double-buffered x) + 2 (f32 h, Hh = H/2) + 4 (f32 product)
    per_row_bytes = T * H * (2 * itemsize + 2 + 4) + 8 * H
    cap = max(1, budget_bytes // per_row_bytes)           # VMEM-capped rows per step
    want = max(1, -(-target_rows // T))                   # rows needed for MXU-row target
    upper = max(1, min(cap, want))

    if B <= upper and B < 16:
        return B                                          # tiny batch: one full-array step

    upper = min(upper, max(8, B // 2))                    # >= 2 grid steps (v7x megacore)

    # Pick the sublane-aligned block that minimizes (padded HBM traffic + per-step
    # pipeline overhead, ~0.35us/step expressed in byte-equivalents).
    step_overhead_bytes = 300_000
    row_traffic = (T * H + H) * itemsize
    best_bb, best_cost = 8, None
    bb = 8
    while bb <= max(8, upper):
        n_steps = -(-B // bb)
        padded = n_steps * bb
        cost = padded * row_traffic + n_steps * step_overhead_bytes
        if best_cost is None or cost <= best_cost:
            best_bb, best_cost = bb, cost
        bb += 8
    return best_bb


def self_attention(x, w1, b1, w2, b2, *, block_b=None):
    B, T, H = x.shape
    Hh = w1.shape[1]

    # Present the rank-1 weight as a lane-dense row for the VPU energy step.
    w2_row = jnp.asarray(w2).reshape(1, Hh)
    b1_2d = jnp.asarray(b1).reshape(1, Hh)
    b2_2d = jnp.asarray(b2).reshape(1, 1)

    # Generation-aware VMEM policy.
    cap_bytes = _vmem_capacity_bytes()
    vmem_limit = (cap_bytes * 7) // 8                 # 112 MiB on v5e/v6e, 56 MiB on v7x
    budget = (cap_bytes * 5) // 16                    # ~40 MiB on v5e/v6e, ~20 MiB on v7x
    target_rows = 512 if cap_bytes >= 96 * 1024 * 1024 else 256

    if block_b is None:
        block_b = _pick_block_b(B, T, H, x.dtype.itemsize, budget, target_rows)
    block_b = max(1, int(block_b))

    # Pad B up to a multiple of block_b: awkward (e.g. prime) batch sizes no longer
    # force 1-row steps, and an explicit caller block_b can never drop rows.
    n_steps = -(-B // block_b)
    B_pad = n_steps * block_b
    x_in = x if B_pad == B else jnp.pad(x, ((0, B_pad - B), (0, 0), (0, 0)))

    out = pl.pallas_call(
        self_attention_kernel,
        out_shape=jax.ShapeDtypeStruct((B_pad, H), x.dtype),
        grid=(n_steps,),
        in_specs=[
            pl.BlockSpec((block_b, T, H), lambda b: (b, 0, 0)),  # x tile per step
            pl.BlockSpec((H, Hh), lambda b: (0, 0)),             # W1 (resident)
            pl.BlockSpec((1, Hh), lambda b: (0, 0)),             # b1
            pl.BlockSpec((1, Hh), lambda b: (0, 0)),             # w2 as a row
            pl.BlockSpec((1, 1), lambda b: (0, 0)),              # b2
        ],
        out_specs=pl.BlockSpec((block_b, H), lambda b: (b, 0)),  # dense 2-D output slab
        compiler_params=pltpu.CompilerParams(
            dimension_semantics=("parallel",),                   # megacore-shard batch axis
            vmem_limit_bytes=int(vmem_limit),
        ),
    )(x_in, w1, b1_2d, w2_row, b2_2d)

    return out if B_pad == B else out[:B]


def self_attention_ref(x, w1, b1, w2, b2):
    # pure-JAX reference matching the PyTorch forward
    energy = jnp.maximum(x @ w1 + jnp.reshape(b1, (1, 1, -1)), 0.0) @ w2
    energy = energy + jnp.reshape(b2, (1, 1, -1))            # (B, T, 1)
    weights = jax.nn.softmax(energy[..., 0], axis=1)         # (B, T)
    return jnp.sum(x * weights[..., None], axis=1)           # (B, H)


if __name__ == "__main__":
    B, T, H = 2, 8, 32
    Hh = H // 2

    key = jax.random.PRNGKey(0)
    kx, k1, k2, k3, k4 = jax.random.split(key, 5)

    x = jax.random.normal(kx, (B, T, H), dtype=jnp.float32)
    # synthetic params matching nn.Linear(H, H//2) and nn.Linear(H//2, 1)
    w1 = 0.1 * jax.random.normal(k1, (H, Hh), dtype=jnp.float32)
    b1 = 0.1 * jax.random.normal(k2, (Hh,), dtype=jnp.float32)
    w2 = 0.1 * jax.random.normal(k3, (Hh, 1), dtype=jnp.float32)
    b2 = 0.1 * jax.random.normal(k4, (1,), dtype=jnp.float32)

    out = jax.block_until_ready(self_attention(x, w1, b1, w2, b2))
    ref = self_attention_ref(x, w1, b1, w2, b2)

    assert out.shape == (B, H)
    # tolerance accounts for the approx (EUP) reciprocal in the softmax denominator
    assert jnp.allclose(out, ref, atol=1e-3, rtol=1e-3), float(jnp.max(jnp.abs(out - ref)))
    print("KERNEL_OK")
</pallas_src>

<mosaic_0001>
module attributes {stable_mosaic.version = 11 : i64} {
  func.func @self_attention_kernel(%arg0: i32, %arg1: memref<2x8x32xf32, #tpu.memory_space<vmem>>, %arg2: memref<32x16xf32, #tpu.memory_space<vmem>>, %arg3: memref<1x16xf32, #tpu.memory_space<vmem>>, %arg4: memref<1x16xf32, #tpu.memory_space<vmem>>, %arg5: memref<1x1xf32, #tpu.memory_space<vmem>>, %arg6: memref<2x32xf32, #tpu.memory_space<vmem>>) attributes {dimension_semantics = [#tpu.dimension_semantics<parallel>], iteration_bounds = array<i64: 1>, scalar_prefetch = 0 : i64, scratch_operands = 0 : i64, tpu.core_type = #tpu.core_type<tc>, window_params = [{transform_indices = @transform_0, window_bounds = array<i64: 2, 8, 32>}, {pipeline_mode = #tpu.pipeline_mode<synchronous>, transform_indices = @transform_1, window_bounds = array<i64: 32, 16>}, {pipeline_mode = #tpu.pipeline_mode<synchronous>, transform_indices = @transform_2, window_bounds = array<i64: 1, 16>}, {pipeline_mode = #tpu.pipeline_mode<synchronous>, transform_indices = @transform_3, window_bounds = array<i64: 1, 16>}, {pipeline_mode = #tpu.pipeline_mode<synchronous>, transform_indices = @transform_4, window_bounds = array<i64: 1, 1>}, {transform_indices = @transform_5, window_bounds = array<i64: 2, 32>}]} {
    %c0 = arith.constant 0 : index
    %c0_0 = arith.constant 0 : index
    %c0_1 = arith.constant 0 : index
    %0 = vector.load %arg1[%c0, %c0_0, %c0_1] : memref<2x8x32xf32, #tpu.memory_space<vmem>>, vector<2x8x32xf32>
    %1 = vector.shape_cast %0 : vector<2x8x32xf32> to vector<16x32xf32>
    %c0_2 = arith.constant 0 : index
    %c0_3 = arith.constant 0 : index
    %2 = vector.load %arg2[%c0_2, %c0_3] : memref<32x16xf32, #tpu.memory_space<vmem>>, vector<32x16xf32>
    %cst = arith.constant dense<0.000000e+00> : vector<16x16xf32>
    %3 = tpu.matmul %1, %2, %cst {dimension_numbers = #tpu.dot_dimension_numbers<[1], [0], [0], [1], [0, 0, 1, 1], [], []>} : vector<16x32xf32>, vector<32x16xf32>, vector<16x16xf32> -> vector<16x16xf32>
    %c0_4 = arith.constant 0 : index
    %c0_5 = arith.constant 0 : index
    %4 = vector.load %arg3[%c0_4, %c0_5] : memref<1x16xf32, #tpu.memory_space<vmem>>, vector<1x16xf32>
    %5 = vector.broadcast %4 : vector<1x16xf32> to vector<16x16xf32>
    %6 = arith.addf %3, %5 : vector<16x16xf32>
    %cst_6 = arith.constant 0.000000e+00 : f32
    %7 = vector.broadcast %cst_6 : f32 to vector<16x16xf32>
    %8 = arith.maximumf %6, %7 : vector<16x16xf32>
    %9 = vector.shape_cast %8 : vector<16x16xf32> to vector<2x8x16xf32>
    %c0_7 = arith.constant 0 : index
    %c0_8 = arith.constant 0 : index
    %10 = vector.load %arg4[%c0_7, %c0_8] : memref<1x16xf32, #tpu.memory_space<vmem>>, vector<1x16xf32>
    %11 = vector.shape_cast %10 : vector<1x16xf32> to vector<1x1x16xf32>
    %12 = vector.broadcast %11 : vector<1x1x16xf32> to vector<2x8x16xf32>
    %13 = arith.mulf %9, %12 : vector<2x8x16xf32>
    %cst_9 = arith.constant dense<0.000000e+00> : vector<2x8xf32>
    %14 = vector.multi_reduction <add>, %13, %cst_9 [2] : vector<2x8x16xf32> to vector<2x8xf32>
    %15 = vector.shape_cast %14 : vector<2x8xf32> to vector<2x8x1xf32>
    %c0_10 = arith.constant 0 : index
    %c0_11 = arith.constant 0 : index
    %16 = vector.load %arg5[%c0_10, %c0_11] : memref<1x1xf32, #tpu.memory_space<vmem>>, vector<1x1xf32>
    %17 = vector.shape_cast %16 : vector<1x1xf32> to vector<1x1x1xf32>
    %18 = vector.broadcast %17 : vector<1x1x1xf32> to vector<2x8x1xf32>
    %19 = arith.addf %15, %18 : vector<2x8x1xf32>
    %cst_12 = arith.constant dense<0xFF800000> : vector<2x1xf32>
    %20 = vector.multi_reduction <maximumf>, %19, %cst_12 [1] : vector<2x8x1xf32> to vector<2x1xf32>
    %21 = vector.shape_cast %20 : vector<2x1xf32> to vector<2x1x1xf32>
    %22 = vector.broadcast %21 : vector<2x1x1xf32> to vector<2x8x1xf32>
    %23 = arith.subf %19, %22 : vector<2x8x1xf32>
    %24 = math.exp %23 : vector<2x8x1xf32>
    %cst_13 = arith.constant dense<0.000000e+00> : vector<2x1xf32>
    %25 = vector.multi_reduction <add>, %24, %cst_13 [1] : vector<2x8x1xf32> to vector<2x1xf32>
    %26 = vector.shape_cast %25 : vector<2x1xf32> to vector<2x1x1xf32>
    %27 = tpu.reciprocal %26 {approx = true} : vector<2x1x1xf32> -> vector<2x1x1xf32>
    %28 = vector.broadcast %27 : vector<2x1x1xf32> to vector<2x8x1xf32>
    %29 = arith.mulf %24, %28 : vector<2x8x1xf32>
    %30 = vector.broadcast %29 : vector<2x8x1xf32> to vector<2x8x32xf32>
    %31 = arith.mulf %0, %30 : vector<2x8x32xf32>
    %cst_14 = arith.constant dense<0.000000e+00> : vector<2x32xf32>
    %32 = vector.multi_reduction <add>, %31, %cst_14 [1] : vector<2x8x32xf32> to vector<2x32xf32>
    %c0_15 = arith.constant 0 : index
    %c0_16 = arith.constant 0 : index
    %33 = vector.load %arg6[%c0_15, %c0_16] : memref<2x32xf32, #tpu.memory_space<vmem>>, vector<2x32xf32>
    tpu.vector_store %arg6[%c0_15, %c0_16], %32 {strides = array<i32>} : memref<2x32xf32, #tpu.memory_space<vmem>>, vector<2x32xf32>,
    return
  }
  func.func @transform_0(%arg0: i32) -> (i32, i32, i32) {
    %c0_i32 = arith.constant 0 : i32
    %c0_i32_0 = arith.constant 0 : i32
    %c0_i32_1 = arith.constant 0 : i32
    return %arg0, %c0_i32, %c0_i32_0 : i32, i32, i32
  }
  func.func @transform_1(%arg0: i32) -> (i32, i32) {
    %c0_i32 = arith.constant 0 : i32
    %c0_i32_0 = arith.constant 0 : i32
    %c0_i32_1 = arith.constant 0 : i32
    return %c0_i32, %c0_i32_0 : i32, i32
  }
  func.func @transform_2(%arg0: i32) -> (i32, i32) {
    %c0_i32 = arith.constant 0 : i32
    %c0_i32_0 = arith.constant 0 : i32
    %c0_i32_1 = arith.constant 0 : i32
    return %c0_i32, %c0_i32_0 : i32, i32
  }
  func.func @transform_3(%arg0: i32) -> (i32, i32) {
    %c0_i32 = arith.constant 0 : i32
    %c0_i32_0 = arith.constant 0 : i32
    %c0_i32_1 = arith.constant 0 : i32
    return %c0_i32, %c0_i32_0 : i32, i32
  }
  func.func @transform_4(%arg0: i32) -> (i32, i32) {
    %c0_i32 = arith.constant 0 : i32
    %c0_i32_0 = arith.constant 0 : i32
    %c0_i32_1 = arith.constant 0 : i32
    return %c0_i32, %c0_i32_0 : i32, i32
  }
  func.func @transform_5(%arg0: i32) -> (i32, i32) {
    %c0_i32 = arith.constant 0 : i32
    %c0_i32_0 = arith.constant 0 : i32
    return %arg0, %c0_i32 : i32, i32
  }
}

</mosaic_0001>

<llo_original>
// kernel: tpu_custom_call.1
$region0: #{tpu_custom_call.1}
  #allocation0 [shape = 'u32[]', space=smem, size = 0x4, offset = 0x4, fixed_abs, tag = 'smem constant byte address 0x4 - core index']
  #allocation1 [shape = 'u32[72,128]{1,0:T(1,128)}', space=vmem, size = 0x9000, scoped, tag = 'internal scratch']
  #allocation2 [shape = 'f32[1,1]{1,0:T(1,128)S(1)}', space=vmem, size = 0x200, scoped, tag = 'scoped memory for tpu_custom_call.1']
  %s0 = inlined_call_operand.vmem [shape: f32[2,8,32], index: 0, kind: input, shape index: {}]
  %s1 = inlined_call_operand.vmem [shape: f32[32,16], index: 1, kind: input, shape index: {}]
  %s2 = inlined_call_operand.vmem [shape: f32[1,16], index: 2, kind: input, shape index: {}]
  %s3 = inlined_call_operand.vmem [shape: f32[1,16], index: 3, kind: input, shape index: {}]
  %s4 = inlined_call_operand.<no memory space> [shape: f32[1,1], index: 4, kind: input, shape index: {}]
  %s5 = inlined_call_operand.hbm [shape: f32[2,32], index: 5, kind: output, shape index: {}]
  %s6 = sld [smem:[#allocation0]]
  $region30: #{tpu_custom_call.1} parent=0
    _
  %s8 = ssub.s32 1, %s6
  %s9 = scalar_select 0, %s8, %s6
  %v10 = vstv %s4
  %11 = vst [vmem:[#allocation2] sm:$0x1] %v10
  $region1: #{tpu_custom_call.1} parent=0
    #allocation3 [shape = 'u8[1024]{0}', space=vmem, size = 0x400, scoped, tag = 'output window, operand 0, single buffered']
    #allocation4 [shape = 's32[1]{0}', space=sflag, size = 0x4, scoped, tag = 'scoped memory for tpu_custom_call.1']
    %12 = vsyncpa [#allocation4], 0
    // Predicated region
    $region2: #{tpu_custom_call.1} parent=1 // pred_check
      _
    $region3: #{tpu_custom_call.1} parent=1 // pred_check_branch
      %14 = sbr.rel (0) target = $region5
    $region4: #{tpu_custom_call.1} parent=1 // pred_region
      _
    $region5: #{tpu_custom_call.1} parent=1 // pred_fallthru
      _
    // Predicated region
    $region6: #{tpu_custom_call.1} parent=1 // pred_check
      _
    $region7: #{tpu_custom_call.1} parent=1 // pred_check_branch
      %16 = sbr.rel (0) target = $region9
    $region8: #{tpu_custom_call.1} parent=1 // pred_region
      _
    $region9: #{tpu_custom_call.1} parent=1 // pred_fallthru
      _
    // Predicated region
    $region10: #{tpu_custom_call.1} parent=1 // pred_check
      _
    $region11: #{tpu_custom_call.1} parent=1 // pred_check_branch
      %18 = sbr.rel (0) target = $region13
    $region12: #{tpu_custom_call.1} parent=1 // pred_region
      _
    $region13: #{tpu_custom_call.1} parent=1 // pred_fallthru
      _
    // Predicated region
    $region14: #{tpu_custom_call.1} parent=1 // pred_check
      _
    $region15: #{tpu_custom_call.1} parent=1 // pred_check_branch
      %20 = sbr.rel (0) target = $region17
    $region16: #{tpu_custom_call.1} parent=1 // pred_region
      _
    $region17: #{tpu_custom_call.1} parent=1 // pred_fallthru
      _
    // Predicated region
    $region18: #{tpu_custom_call.1} parent=1 // pred_check
      _
    $region19: #{tpu_custom_call.1} parent=1 // pred_check_branch
      %22 = sbr.rel (0) target = $region21
    $region20: #{tpu_custom_call.1} parent=1 // pred_region
      _
    $region21: #{tpu_custom_call.1} parent=1 // pred_fallthru
      _
    %v23 = vld [vmem:[%s0] sm:$0xff]
    %v24 = vld [vmem:[%s0 + $0x8] sm:$0xff]
    %v25 = vld [vmem:[%s1] sm:$0xff]
    %v26 = vld [vmem:[%s1 + $0x8] sm:$0xff]
    %v27 = vld [vmem:[%s1 + $0x10] sm:$0xff]
    %v28 = vld [vmem:[%s1 + $0x18] sm:$0xff]
    %v29 = vld [vmem:[%s2] sm:$0x1]
    %v31 = vperm.slane %v29, 0
    %vm33 = vcmask 261120
    %v35 = vsel %vm33, %v23, 0
    %v38 = vsel %vm33, %v24, 0
    %40 = vmatpush.msra.mxu0 0.0
    %41 = vmatpush.msra.mxu0 0.0
    %42 = vmatpush.msra.mxu0 0.0
    %43 = vmatpush.msra.mxu0 0.0
    %44 = vmatpush.msra.mxu0 0.0
    %45 = vmatpush.msra.mxu0 0.0
    %46 = vmatpush.msra.mxu0 0.0
    %47 = vmatpush.msra.mxu0 0.0
    %48 = vmatpush.msra.mxu0 0.0
    %49 = vmatpush.msra.mxu0 0.0
    %50 = vmatpush.msra.mxu0 0.0
    %51 = vmatpush.msra.mxu0 0.0
    %52 = vmatpush.msra.mxu0 %v28
    %53 = vmatpush.msra.mxu0 %v27
    %54 = vmatpush.msra.mxu0 %v26
    %55 = vmatpush.msra.mxu0 %v25
    %56 = vmatmul.f32.gmra.mxu0 %v35
    %v57 = vpop.f32.mrf.mxu0
    %v58 = vadd.f32 %v31, %v57
    %59 = vmatmul.f32.gmra.mxu0 %v38
    %v60 = vpop.f32.mrf.mxu0
    %v61 = vadd.f32 %v31, %v60
    %62 = vdwg.mxu0
    %v63 = vmax.f32 %v58, 0.0
    %v64 = vmax.f32 %v61, 0.0
    %v65 = vld [vmem:[%s3] sm:$0x1]
    %v67 = vperm.slane %v65, 0
    %v69 = vmul.f32 %v63, %v67
    %v70 = vmul.f32 %v64, %v67
    %vm71 = vcmask 130048
    %v72 = vsel %vm71, %v69, 0.0
    %73 = vadd.xlane.f32.xlu0 %v72
    %v74 = vpop.xlane.xlu0 %73
    %v75 = vsel %vm71, %v70, 0.0
    %76 = vadd.xlane.f32.xlu0 %v75
    %v77 = vpop.xlane.xlu0 %76
    %v78 = vld [vmem:[#allocation2] sm:$0x1]
    %v80 = vperm.slane %v78, 0
    %v82 = vadd.f32 %v74, %v80
    %v83 = vadd.f32 %v77, %v80
    %vm84 = vcmask 7168
    %v85 = vsel %vm84, %v82, -inf
    %v86 = vrot.slane %v85, 4
    %v87 = vmax.f32 %v85, %v86
    %v88 = vrot.slane %v87, 2
    %v89 = vmax.f32 %v87, %v88
    %v90 = vrot.slane %v89, 1
    %v91 = vmax.f32 %v89, %v90
    %v92 = vsel %vm84, %v83, -inf
    %v93 = vrot.slane %v92, 4
    %v94 = vmax.f32 %v92, %v93
    %v95 = vrot.slane %v94, 2
    %v96 = vmax.f32 %v94, %v95
    %v97 = vrot.slane %v96, 1
    %v98 = vmax.f32 %v96, %v97
    %v99 = vsub.f32 %v82, %v91
    %v100 = vsub.f32 %v83, %v98
    %v101 = vmul.f32 %v99, 1.442695
    %v102 = vpow.pop %v101
    %v103 = vmul.f32 %v100, 1.442695
    %v104 = vpow.pop %v103
    %v105 = vsel %vm84, %v102, 0.0
    %v106 = vrot.slane %v105, 4
    %v107 = vadd.f32 %v105, %v106
    %v108 = vrot.slane %v107, 2
    %v109 = vadd.f32 %v107, %v108
    %v110 = vrot.slane %v109, 1
    %v111 = vadd.f32 %v109, %v110
    %v112 = vsel %vm84, %v104, 0.0
    %v113 = vrot.slane %v112, 4
    %v114 = vadd.f32 %v112, %v113
    %v115 = vrot.slane %v114, 2
    %v116 = vadd.f32 %v114, %v115
    %v117 = vrot.slane %v116, 1
    %v118 = vadd.f32 %v116, %v117
    %v119 = vrcp.pop %v111
    %v120 = vrcp.pop %v118
    %v121 = vmul.f32 %v102, %v119
    %v122 = vmul.f32 %v104, %v120
    %124 = vset.pattern.permute.xlu0 0
    %125 = vperm.xlu0 %124, %v121
    %v126 = vpop.permute.xlu0 %125
    %129 = vset.pattern.permute.xlu0 0
    %130 = vperm.xlu0 %129, %v122
    %v131 = vpop.permute.xlu0 %130
    %v133 = vmul.f32 %v23, %v126
    %v134 = vmul.f32 %v24, %v131
    %v135 = vsel %vm33, %v133, 0.0
    %v136 = vrot.slane %v135, 4
    %v137 = vadd.f32 %v135, %v136
    %v138 = vrot.slane %v137, 2
    %v139 = vadd.f32 %v137, %v138
    %v140 = vrot.slane %v139, 1
    %v141 = vadd.f32 %v139, %v140
    %v142 = vsel %vm33, %v134, 0.0
    %v143 = vrot.slane %v142, 4
    %v144 = vadd.f32 %v142, %v143
    %v145 = vrot.slane %v144, 2
    %v146 = vadd.f32 %v144, %v145
    %v147 = vrot.slane %v146, 1
    %v148 = vadd.f32 %v146, %v147
    %vm151 = vcmask 1041409
    %v152 = vsel %vm151, %v148, %v141
    %vm154 = vcmask 254976
    %155 = vst.msk [vmem:[#allocation3] sm:$0x3] %vm154, %v152
    // Predicated region
    $region22: #{tpu_custom_call.1} parent=1 // pred_check
      _
    $region23: #{tpu_custom_call.1} parent=1 // pred_check_branch
      %157 = sbr.rel (0) target = $region25
    $region24: #{tpu_custom_call.1} parent=1 // pred_region
      %159 = vsyncadd [#allocation4], 0
      %s161 = sshll.u32 [#allocation3], 4
      %s162 = int_to_ptr.vmem [resolvable:$true] %s161
      %s163 = sshll.u32 %s5, 4
      %s164 = int_to_ptr.hbm [resolvable:$true] %s163
      %166 = dma.vmem_to_hbm [thread:$0]  %s162, 32, %s164, [#allocation4]
    $region25: #{tpu_custom_call.1} parent=1 // pred_fallthru
      _
    // Predicated region
    $region26: #{tpu_custom_call.1} parent=1 // pred_check
      _
    $region27: #{tpu_custom_call.1} parent=1 // pred_check_branch
      %168 = sbr.rel (0) target = $region29
    $region28: #{tpu_custom_call.1} parent=1 // pred_region
      %170 = dma.done [#allocation4], 32
    $region29: #{tpu_custom_call.1} parent=1 // pred_fallthru
      _
    %171 = vsyncpa [#allocation4], 1

</llo_original>
